<compile_context>
chip_gen: v5e
topology: v5e:2x2
jax: 0.10.0
libtpu: 0.0.40
codegen_flags: <defaults>
</compile_context>

<pallas_src>
import functools
import math

import jax
import jax.numpy as jnp
from jax.experimental import pallas as pl
from jax.experimental.pallas import tpu as pltpu


def _build_pe_table(max_seq_len: int, d_model: int) -> jnp.ndarray:
    """Reproduce the (non-standard) PyTorch init loop exactly:
         pe[pos, i]   = sin(pos / 10000 ** (2 * i       / d_model))   (i even)
         pe[pos, i+1] = cos(pos / 10000 ** (2 * (i + 1) / d_model))
       => for column j: exponent = 2*j/d_model; even j -> sin, odd j -> cos.
    """
    pos = jnp.arange(max_seq_len, dtype=jnp.float32)[:, None]          # (S, 1)
    j = jnp.arange(d_model, dtype=jnp.float32)[None, :]                # (1, D)
    denom = jnp.power(10000.0, 2.0 * j / float(d_model))               # (1, D)
    angle = pos / denom                                                # (S, D)
    is_even = (jnp.arange(d_model) % 2 == 0)[None, :]                  # (1, D)
    return jnp.where(is_even, jnp.sin(angle), jnp.cos(angle))          # (S, D)


def _pos_enc_kernel(x_ref, pe_ref, o_ref, *, scale, batch):
    # x_ref / o_ref: (TS, batch * d_model) lane-dense; pe_ref: (TS, d_model).
    # Flattened row layout is [b0: d0..dD-1 | b1: d0..dD-1 | ...], so replicating
    # pe along the lane axis `batch` times matches the broadcast over batch.
    pe_row = jnp.tile(pe_ref[...], (1, batch))           # (TS, batch*d_model)
    o_ref[...] = x_ref[...] * scale + pe_row


def _choose_tile_rows(seq_len: int, row_bytes: int,
                      target_bytes: int = 2 * 1024 * 1024) -> int:
    """Pick a seq-tile size: ~2 MiB per x tile.  VMEM budget (worst case,
    batch=1): 2 bufs * (x + out + pe) ~= 12 MiB < v5e's 16 MiB scoped default.
    Rows are a multiple of 8 unless the block covers the full seq extent
    (either satisfies the (8,128) block constraint; ragged tail is masked)."""
    rows = max(8, (target_bytes // max(row_bytes, 1)) // 8 * 8)
    if rows >= seq_len:
        return seq_len            # single full-extent block (still lane-dense)
    return rows


@jax.jit
def positional_encoder(x: jnp.ndarray, pe_table: jnp.ndarray) -> jnp.ndarray:
    """x: (seq_len, batch, d_model); pe_table: (max_seq_len, d_model) float32."""
    seq_len, batch, d_model = x.shape
    scale = float(math.sqrt(d_model))

    # Glue (plain JAX, fused by jit): slice buffer, match dtype, lane-dense view.
    pe = pe_table[:seq_len].astype(x.dtype)              # (S, D)
    bd = batch * d_model
    x2d = x.reshape(seq_len, bd)                         # free row-major view

    itemsize = jnp.dtype(x.dtype).itemsize
    ts = _choose_tile_rows(seq_len, bd * itemsize)
    grid = (pl.cdiv(seq_len, ts),)

    kernel = functools.partial(_pos_enc_kernel, scale=scale, batch=batch)
    out2d = pl.pallas_call(
        kernel,
        out_shape=jax.ShapeDtypeStruct((seq_len, bd), x.dtype),
        grid=grid,
        in_specs=[
            pl.BlockSpec((ts, bd), lambda i: (i, 0)),        # x tile
            pl.BlockSpec((ts, d_model), lambda i: (i, 0)),   # pe tile
        ],
        out_specs=pl.BlockSpec((ts, bd), lambda i: (i, 0)),
        compiler_params=pltpu.CompilerParams(
            dimension_semantics=("parallel",),   # shard seq across v7x's 2 TCs
        ),
    )(x2d, pe)

    return out2d.reshape(seq_len, batch, d_model)


if __name__ == "__main__":
    d_model = 32
    max_seq_len = 160
    seq_len = 8
    batch = 2

    pe_table = _build_pe_table(max_seq_len, d_model)

    key = jax.random.PRNGKey(0)
    x = jax.random.normal(key, (seq_len, batch, d_model), dtype=jnp.float32)

    out = positional_encoder(x, pe_table)
    out = jax.block_until_ready(out)

    # Reference check in plain JAX (same math as the PyTorch forward).
    ref = x * math.sqrt(d_model) + pe_table[:seq_len][:, None, :]
    assert out.shape == (seq_len, batch, d_model)
    assert jnp.allclose(out, ref, atol=1e-5, rtol=1e-5)

    # Second check: longer sequence (multi-tile / ragged-safe lane-dense path).
    seq2, batch2 = max_seq_len, 4
    x2 = jax.random.normal(jax.random.PRNGKey(1), (seq2, batch2, d_model),
                           dtype=jnp.float32)
    out2 = jax.block_until_ready(positional_encoder(x2, pe_table))
    ref2 = x2 * math.sqrt(d_model) + pe_table[:seq2][:, None, :]
    assert jnp.allclose(out2, ref2, atol=1e-5, rtol=1e-5)

    print("KERNEL_OK")
</pallas_src>

<mosaic_0001>
module attributes {stable_mosaic.version = 11 : i64} {
  func.func @_pos_enc_kernel(%arg0: i32, %arg1: memref<8x64xf32, #tpu.memory_space<vmem>>, %arg2: memref<8x32xf32, #tpu.memory_space<vmem>>, %arg3: memref<8x64xf32, #tpu.memory_space<vmem>>) attributes {dimension_semantics = [#tpu.dimension_semantics<parallel>], iteration_bounds = array<i64: 1>, scalar_prefetch = 0 : i64, scratch_operands = 0 : i64, tpu.core_type = #tpu.core_type<tc>, window_params = [{transform_indices = @transform_0, window_bounds = array<i64: 8, 64>}, {transform_indices = @transform_1, window_bounds = array<i64: 8, 32>}, {transform_indices = @transform_2, window_bounds = array<i64: 8, 64>}]} {
    %c0 = arith.constant 0 : index
    %c0_0 = arith.constant 0 : index
    %0 = vector.load %arg2[%c0, %c0_0] : memref<8x32xf32, #tpu.memory_space<vmem>>, vector<8x32xf32>
    %1 = tpu.concatenate %0, %0 in 1 : vector<8x32xf32>, vector<8x32xf32> -> vector<8x64xf32>
    %c0_1 = arith.constant 0 : index
    %c0_2 = arith.constant 0 : index
    %2 = vector.load %arg1[%c0_1, %c0_2] : memref<8x64xf32, #tpu.memory_space<vmem>>, vector<8x64xf32>
    %cst = arith.constant 5.65685415 : f32
    %3 = vector.broadcast %cst : f32 to vector<8x64xf32>
    %4 = arith.mulf %2, %3 : vector<8x64xf32>
    %5 = arith.addf %4, %1 : vector<8x64xf32>
    %c0_3 = arith.constant 0 : index
    %c0_4 = arith.constant 0 : index
    %6 = vector.load %arg3[%c0_3, %c0_4] : memref<8x64xf32, #tpu.memory_space<vmem>>, vector<8x64xf32>
    tpu.vector_store %arg3[%c0_3, %c0_4], %5 {strides = array<i32>} : memref<8x64xf32, #tpu.memory_space<vmem>>, vector<8x64xf32>,
    return
  }
  func.func @transform_0(%arg0: i32) -> (i32, i32) {
    %c0_i32 = arith.constant 0 : i32
    %c0_i32_0 = arith.constant 0 : i32
    return %arg0, %c0_i32 : i32, i32
  }
  func.func @transform_1(%arg0: i32) -> (i32, i32) {
    %c0_i32 = arith.constant 0 : i32
    %c0_i32_0 = arith.constant 0 : i32
    return %arg0, %c0_i32 : i32, i32
  }
  func.func @transform_2(%arg0: i32) -> (i32, i32) {
    %c0_i32 = arith.constant 0 : i32
    %c0_i32_0 = arith.constant 0 : i32
    return %arg0, %c0_i32 : i32, i32
  }
}

</mosaic_0001>

<llo_original>
// kernel: positional_encoder.1
$region0: #{positional_encoder.1}
  #allocation0 [shape = 'u32[]', space=smem, size = 0x4, offset = 0x4, fixed_abs, tag = 'smem constant byte address 0x4 - core index']
  #allocation1 [shape = 'u32[72,128]{1,0:T(1,128)}', space=vmem, size = 0x9000, scoped, tag = 'internal scratch']
  %s0 = inlined_call_operand.vmem [shape: f32[8,64], index: 0, kind: input, shape index: {}]
  %s1 = inlined_call_operand.vmem [shape: f32[8,32], index: 1, kind: input, shape index: {}]
  %s2 = inlined_call_operand.vmem [shape: f32[8,64], index: 2, kind: output, shape index: {}]
  %s3 = sld [smem:[#allocation0]]
  $region18: #{positional_encoder.1} parent=0
    _
  %s5 = ssub.s32 1, %s3
  %s6 = scalar_select 0, %s5, %s3
  // Predicated region
  $region2: #{positional_encoder.1} parent=0 // pred_check
    _
  $region3: #{positional_encoder.1} parent=0 // pred_check_branch
    %8 = sbr.rel (0) target = $region5
  $region4: #{positional_encoder.1} parent=0 // pred_region
    _
  $region5: #{positional_encoder.1} parent=0 // pred_fallthru
    _
  // Predicated region
  $region6: #{positional_encoder.1} parent=0 // pred_check
    _
  $region7: #{positional_encoder.1} parent=0 // pred_check_branch
    %10 = sbr.rel (0) target = $region9
  $region8: #{positional_encoder.1} parent=0 // pred_region
    _
  $region9: #{positional_encoder.1} parent=0 // pred_fallthru
    _
  %v11 = vld [vmem:[%s1] sm:$0xff]
  %13 = vrot.lane.b32.xlu0 %v11, 32
  %v14 = vpop.permute.xlu0 %13
  %vm16 = vcmask 261120
  %v17 = vsel %vm16, %v11, %v14
  %v18 = vld [vmem:[%s0] sm:$0xff]
  %v19 = vmul.f32 %v18, 5.656854
  %v20 = vadd.f32 %v19, %v17
  %vm21 = vcmask 523264
  %22 = vst.msk [vmem:[%s2] sm:$0xff] %vm21, %v20
  // Predicated region
  $region10: #{positional_encoder.1} parent=0 // pred_check
    _
  $region11: #{positional_encoder.1} parent=0 // pred_check_branch
    %24 = sbr.rel (0) target = $region13
  $region12: #{positional_encoder.1} parent=0 // pred_region
    _
  $region13: #{positional_encoder.1} parent=0 // pred_fallthru
    _
  // Predicated region
  $region14: #{positional_encoder.1} parent=0 // pred_check
    _
  $region15: #{positional_encoder.1} parent=0 // pred_check_branch
    %26 = sbr.rel (0) target = $region17
  $region16: #{positional_encoder.1} parent=0 // pred_region
    _
  $region17: #{positional_encoder.1} parent=0 // pred_fallthru
    _

</llo_original>
